<compile_context>
chip_gen: v6e
topology: v6e:2x2x1
jax: 0.10.0
libtpu: 0.0.40
codegen_flags: <defaults>
</compile_context>

<pallas_src>
import numpy as np
import jax
import jax.numpy as jnp
from jax.experimental import pallas as pl
from jax.experimental.pallas import tpu as pltpu

# ---- deterministic parameter construction (matches _build_kernel) ----------
_FILTER1 = np.asarray(
    [[0, 0, 0, 0, 0],
     [0, -1, 2, -1, 0],
     [0, 2, -4, 2, 0],
     [0, -1, 2, -1, 0],
     [0, 0, 0, 0, 0]], dtype=np.float32) / 4.0
_FILTER2 = np.asarray(
    [[-1, 2, -2, 2, -1],
     [2, -6, 8, -6, 2],
     [-2, 8, -12, 8, -2],
     [2, -6, 8, -6, 2],
     [-1, 2, -2, 2, -1]], dtype=np.float32) / 12.0
_FILTER3 = np.asarray(
    [[0, 0, 0, 0, 0],
     [0, 0, 0, 0, 0],
     [0, 1, -2, 1, 0],
     [0, 0, 0, 0, 0],
     [0, 0, 0, 0, 0]], dtype=np.float32) / 2.0
# Full parameter tensor of the module, shape (3, 1, 5, 5).  Only [0:1] is used
# in forward (the module applies filter1 to every channel).
SRM_KERNEL = np.stack([_FILTER1, _FILTER2, _FILTER3])[:, None, :, :]

PAD = 2          # module's conv padding (5x5 filter)
CORE_PAD = 1     # effective padding of filter1's nonzero 3x3 core


def _srm_kernel(x_ref, o_ref, xp_ref):
    """x_ref: (TB, H, W) raw planes; o_ref: (TB, H, W); xp_ref: (TB, H+2, W+2) scratch."""
    TB, H, W = o_ref.shape

    # In-kernel zero padding (1-pixel halo of the effective 3x3 core).
    # Zeroing the whole scratch every step keeps it correct regardless of how
    # the parallel grid axis is sharded across TensorCores.
    xp_ref[...] = jnp.zeros_like(xp_ref)
    xp_ref[:, 1:H + 1, 1:W + 1] = x_ref[...].astype(jnp.float32)
    xp = xp_ref[...]                                        # (TB, H+2, W+2)

    # Separable factorization of filter1's 3x3 core:
    #   core = -(1/4) * outer([1, -2, 1], [1, -2, 1])
    # Horizontal 3-tap pass over all padded rows:
    g = (xp[:, :, 0:W] + xp[:, :, 2:W + 2]) - 2.0 * xp[:, :, 1:W + 1]   # (TB, H+2, W)
    # Vertical 3-tap pass + single final scale:
    out = (g[:, 0:H, :] + g[:, 2:H + 2, :]) - 2.0 * g[:, 1:H + 1, :]    # (TB, H, W)
    out = out * (-0.25)

    # Hardtanh(-3, 3)
    o_ref[...] = jnp.clip(out, -3.0, 3.0).astype(o_ref.dtype)


def _choose_tile_b(nb, h, w, budget_bytes=24 << 20, min_steps=2):
    """Largest divisor of nb whose per-block VMEM footprint fits the budget,
    preferring a grid with >= min_steps steps (keeps both v7x TCs busy)."""
    lane = lambda n: ((n + 127) // 128) * 128
    sub = lambda n: ((n + 7) // 8) * 8
    # f32: in + out double-buffered, scratch single-buffered (lane/sublane padded).
    per_plane = 4 * (2 * 2 * sub(h) * lane(w) + sub(h + 2) * lane(w + 2))
    divisors = [d for d in range(1, nb + 1) if nb % d == 0]
    fit = [d for d in divisors if d * per_plane <= budget_bytes] or [1]
    tb = max(fit)
    if nb // tb < min_steps:
        multi = [d for d in fit if nb // d >= min_steps]
        if multi:
            tb = max(multi)
    return tb


def srm_conv2d_transform(img):
    """img: (N, 3, H, W) float32 in NCHW layout.  Returns (N, 3, H, W)."""
    N, C, H, W = img.shape
    assert C == 3, "module splits R/G/B channels; expects 3 input channels"

    nb = N * C
    x = img.reshape(nb, H, W)                 # free: contiguous reshape, no HBM pass
    tile_b = _choose_tile_b(nb, H, W)
    grid = (nb // tile_b,)

    flops = 9 * nb * H * W
    bytes_accessed = 2 * nb * H * W * img.dtype.itemsize

    out = pl.pallas_call(
        _srm_kernel,
        out_shape=jax.ShapeDtypeStruct((nb, H, W), img.dtype),
        grid_spec=pltpu.PrefetchScalarGridSpec(
            num_scalar_prefetch=0,
            grid=grid,
            in_specs=[pl.BlockSpec((tile_b, H, W), lambda b: (b, 0, 0))],
            out_specs=pl.BlockSpec((tile_b, H, W), lambda b: (b, 0, 0)),
            scratch_shapes=[pltpu.VMEM((tile_b, H + 2 * CORE_PAD, W + 2 * CORE_PAD),
                                       jnp.float32)],
        ),
        compiler_params=pltpu.CompilerParams(
            dimension_semantics=("parallel",),
            vmem_limit_bytes=48 << 20),
        cost_estimate=pl.CostEstimate(
            flops=flops, transcendentals=0, bytes_accessed=bytes_accessed),
    )(x)
    return out.reshape(N, C, H, W)


def _reference(img):
    """Independent reference using lax.conv (mirrors the PyTorch forward)."""
    k = jnp.asarray(SRM_KERNEL[0:1])  # (1, 1, 5, 5)
    outs = []
    for c in range(3):
        ch = img[:, c:c + 1, :, :]
        o = jax.lax.conv_general_dilated(
            ch, k, window_strides=(1, 1), padding=((PAD, PAD), (PAD, PAD)),
            dimension_numbers=("NCHW", "OIHW", "NCHW"))
        outs.append(o)
    out = jnp.concatenate(outs, axis=1)
    return jnp.clip(out, -3.0, 3.0)


if __name__ == "__main__":
    key = jax.random.PRNGKey(0)
    # Small NCHW input consistent with the module (3 channels required).
    x = jax.random.normal(key, (2, 3, 16, 16), dtype=jnp.float32)

    y = jax.block_until_ready(srm_conv2d_transform(x))
    y_ref = jax.block_until_ready(_reference(x))

    np.testing.assert_allclose(np.asarray(y), np.asarray(y_ref),
                               atol=1e-5, rtol=1e-5)
    print("KERNEL_OK")
</pallas_src>

<mosaic_0001>
module attributes {stable_mosaic.version = 11 : i64} {
  func.func @_srm_kernel(%arg0: i32, %arg1: memref<3x16x16xf32, #tpu.memory_space<vmem>>, %arg2: memref<3x16x16xf32, #tpu.memory_space<vmem>>, %arg3: memref<3x18x18xf32, #tpu.memory_space<vmem>>) attributes {dimension_semantics = [#tpu.dimension_semantics<parallel>], iteration_bounds = array<i64: 2>, scalar_prefetch = 0 : i64, scratch_operands = 1 : i64, tpu.core_type = #tpu.core_type<tc>, window_params = [{transform_indices = @transform_0, window_bounds = array<i64: 3, 16, 16>}, {transform_indices = @transform_1, window_bounds = array<i64: 3, 16, 16>}]} {
    %cst = arith.constant 0.000000e+00 : f32
    %0 = vector.broadcast %cst : f32 to vector<3x18x18xf32>
    %c0 = arith.constant 0 : index
    %c0_0 = arith.constant 0 : index
    %c0_1 = arith.constant 0 : index
    %1 = vector.load %arg3[%c0, %c0_0, %c0_1] : memref<3x18x18xf32, #tpu.memory_space<vmem>>, vector<3x18x18xf32>
    tpu.vector_store %arg3[%c0, %c0_0, %c0_1], %0 {strides = array<i32>} : memref<3x18x18xf32, #tpu.memory_space<vmem>>, vector<3x18x18xf32>,
    %c0_2 = arith.constant 0 : index
    %c0_3 = arith.constant 0 : index
    %c0_4 = arith.constant 0 : index
    %2 = vector.load %arg1[%c0_2, %c0_3, %c0_4] : memref<3x16x16xf32, #tpu.memory_space<vmem>>, vector<3x16x16xf32>
    %c0_5 = arith.constant 0 : index
    %c1 = arith.constant 1 : index
    %c1_6 = arith.constant 1 : index
    %3 = vector.load %arg3[%c0_5, %c1, %c1_6] : memref<3x18x18xf32, #tpu.memory_space<vmem>>, vector<3x16x16xf32>
    tpu.vector_store %arg3[%c0_5, %c1, %c1_6], %2 {strides = array<i32>} : memref<3x18x18xf32, #tpu.memory_space<vmem>>, vector<3x16x16xf32>,
    %c0_7 = arith.constant 0 : index
    %c0_8 = arith.constant 0 : index
    %c0_9 = arith.constant 0 : index
    %4 = vector.load %arg3[%c0_7, %c0_8, %c0_9] : memref<3x18x18xf32, #tpu.memory_space<vmem>>, vector<3x18x18xf32>
    %5 = vector.extract_strided_slice %4 {offsets = [0, 0, 0], sizes = [3, 18, 16], strides = [1, 1, 1]} : vector<3x18x18xf32> to vector<3x18x16xf32>
    %6 = vector.extract_strided_slice %4 {offsets = [0, 0, 2], sizes = [3, 18, 16], strides = [1, 1, 1]} : vector<3x18x18xf32> to vector<3x18x16xf32>
    %7 = arith.addf %5, %6 : vector<3x18x16xf32>
    %8 = vector.extract_strided_slice %4 {offsets = [0, 0, 1], sizes = [3, 18, 16], strides = [1, 1, 1]} : vector<3x18x18xf32> to vector<3x18x16xf32>
    %cst_10 = arith.constant 2.000000e+00 : f32
    %9 = vector.broadcast %cst_10 : f32 to vector<3x18x16xf32>
    %10 = arith.mulf %9, %8 : vector<3x18x16xf32>
    %11 = arith.subf %7, %10 : vector<3x18x16xf32>
    %12 = vector.extract_strided_slice %11 {offsets = [0, 0, 0], sizes = [3, 16, 16], strides = [1, 1, 1]} : vector<3x18x16xf32> to vector<3x16x16xf32>
    %13 = vector.extract_strided_slice %11 {offsets = [0, 2, 0], sizes = [3, 16, 16], strides = [1, 1, 1]} : vector<3x18x16xf32> to vector<3x16x16xf32>
    %14 = arith.addf %12, %13 : vector<3x16x16xf32>
    %15 = vector.extract_strided_slice %11 {offsets = [0, 1, 0], sizes = [3, 16, 16], strides = [1, 1, 1]} : vector<3x18x16xf32> to vector<3x16x16xf32>
    %cst_11 = arith.constant 2.000000e+00 : f32
    %16 = vector.broadcast %cst_11 : f32 to vector<3x16x16xf32>
    %17 = arith.mulf %16, %15 : vector<3x16x16xf32>
    %18 = arith.subf %14, %17 : vector<3x16x16xf32>
    %cst_12 = arith.constant -2.500000e-01 : f32
    %19 = vector.broadcast %cst_12 : f32 to vector<3x16x16xf32>
    %20 = arith.mulf %18, %19 : vector<3x16x16xf32>
    %cst_13 = arith.constant -3.000000e+00 : f32
    %cst_14 = arith.constant 3.000000e+00 : f32
    %21 = vector.broadcast %cst_13 : f32 to vector<3x16x16xf32>
    %22 = arith.maximumf %21, %20 : vector<3x16x16xf32>
    %23 = vector.broadcast %cst_14 : f32 to vector<3x16x16xf32>
    %24 = arith.minimumf %23, %22 : vector<3x16x16xf32>
    %c0_15 = arith.constant 0 : index
    %c0_16 = arith.constant 0 : index
    %c0_17 = arith.constant 0 : index
    %25 = vector.load %arg2[%c0_15, %c0_16, %c0_17] : memref<3x16x16xf32, #tpu.memory_space<vmem>>, vector<3x16x16xf32>
    tpu.vector_store %arg2[%c0_15, %c0_16, %c0_17], %24 {strides = array<i32>} : memref<3x16x16xf32, #tpu.memory_space<vmem>>, vector<3x16x16xf32>,
    return
  }
  func.func @transform_0(%arg0: i32) -> (i32, i32, i32) {
    %c0_i32 = arith.constant 0 : i32
    %c0_i32_0 = arith.constant 0 : i32
    %c0_i32_1 = arith.constant 0 : i32
    return %arg0, %c0_i32, %c0_i32_0 : i32, i32, i32
  }
  func.func @transform_1(%arg0: i32) -> (i32, i32, i32) {
    %c0_i32 = arith.constant 0 : i32
    %c0_i32_0 = arith.constant 0 : i32
    %c0_i32_1 = arith.constant 0 : i32
    return %arg0, %c0_i32, %c0_i32_0 : i32, i32, i32
  }
}

</mosaic_0001>

<llo_original>
// kernel: tpu_custom_call.1
$region0: #{tpu_custom_call.1}
  #allocation0 [shape = 'u32[]', space=smem, size = 0x4, offset = 0x4, fixed_abs, tag = 'smem constant byte address 0x4 - core index']
  #allocation1 [shape = 'u32[144,128]{1,0:T(1,128)}', space=vmem, size = 0x12000, scoped, tag = 'internal scratch']
  #allocation2 [shape = 'f32[3,18,18]{2,1,0:T(8,128)}', space=vmem, size = 0x9000, scoped, tag = 'scratch operand']
  %s0 = inlined_call_operand.hbm [shape: f32[6,16,16], index: 0, kind: input, shape index: {}]
  %s1 = inlined_call_operand.hbm [shape: f32[6,16,16], index: 1, kind: output, shape index: {}]
  %s2 = sld [smem:[#allocation0]]
  $region41: #{tpu_custom_call.1} parent=0
    _
  %s4 = ssub.s32 1, %s2
  %s5 = scalar_select 0, %s4, %s2
  $region1: #{tpu_custom_call.1} parent=0
    #allocation3 [shape = 'u8[49152]{0}', space=vmem, size = 0xc000, scoped, tag = 'input window, operand 0']
    #allocation4 [shape = 's32[2]{0}', space=sflag, size = 0x8, scoped, tag = 'scoped memory for tpu_custom_call.1']
    #allocation5 [shape = 's32[2]{0}', space=sflag, size = 0x8, scoped, tag = 'scoped memory for tpu_custom_call.1']
    #allocation6 [shape = 'u8[49152]{0}', space=vmem, size = 0xc000, scoped, tag = 'output window, operand 0']
    %6 = vsyncpa [#allocation4], 0
    %s7 = scalar_lea.sflag [#allocation4], 1
    %8 = vsyncpa %s7, 0
    %9 = vsyncpa [#allocation5], 0
    %s10 = scalar_lea.sflag [#allocation5], 1
    %11 = vsyncpa %s10, 0
    loop: start=0, step=1, limit=4
    $region2: #{tpu_custom_call.1} parent=1 // loop_pre_header
      _
    $region3: #{tpu_custom_call.1} parent=1 // loop_header
      %s13 = sphi 0, %s17
      %p14 = scmp.ge.s32.totalorder %s13, 4
      %s23 = sphi 0, %s25
      %s26 = sphi 0, %s23
      %s27 = sphi 0, %s26
      %s43 = sphi 0, %s27
      %s49 = sphi 0, %s51
      %s52 = sphi 0, %s49
      %s53 = sphi 0, %s52
      %s69 = sphi 0, %s53
    $region4: #{tpu_custom_call.1} parent=1 // loop_header_branch
      %16 = sbr.rel (%p14) target = $region8
    $region5: #{tpu_custom_call.1} parent=1 // loop_body
      %s18 = ssub.s32 %s13, 1
      %s19 = ssub.s32 %s13, 2
      %s20 = sadd.s32 %s13, 1
      %s21 = ssub.s32 %s13, %s20
      %p22 = scmp.eq.s32.totalorder %s21, 0
      %s24 = sadd.s32 %s23, 1
      %s25 = scalar_select %p22, %s23, %s24
      %p28 = pneg %p22
      %p29 = scmp.eq.s32.totalorder %s13, 1
      %p30 = por %p28, %p29
      %p31 = scmp.ne.s32.totalorder %s23, %s26
      %p32 = scmp.eq.s32.totalorder %s13, 0
      %p33 = por %p31, %p32
      %p34 = scmp.ne.s32.totalorder %s23, %s26
      %p35 = scmp.eq.s32.totalorder %s18, 1
      %p36 = por %p34, %p35
      %p37 = scmp.ne.s32.totalorder %s26, %s27
      %p38 = scmp.eq.s32.totalorder %s18, 0
      %p39 = por %p37, %p38
      %p40 = scmp.ne.s32.totalorder %s26, %s27
      %p41 = scmp.eq.s32.totalorder %s19, 1
      %p42 = por %p40, %p41
      %p44 = scmp.ne.s32.totalorder %s27, %s43
      %p45 = scmp.eq.s32.totalorder %s19, 0
      %p46 = por %p44, %p45
      %s47 = ssub.s32 %s13, %s20
      %p48 = scmp.eq.s32.totalorder %s47, 0
      %s50 = sadd.s32 %s49, 1
      %s51 = scalar_select %p48, %s49, %s50
      %p54 = pneg %p48
      %p55 = scmp.eq.s32.totalorder %s13, 1
      %p56 = por %p54, %p55
      %p57 = scmp.ne.s32.totalorder %s49, %s52
      %p58 = scmp.eq.s32.totalorder %s13, 0
      %p59 = por %p57, %p58
      %p60 = scmp.ne.s32.totalorder %s49, %s52
      %p61 = scmp.eq.s32.totalorder %s18, 1
      %p62 = por %p60, %p61
      %p63 = scmp.ne.s32.totalorder %s52, %s53
      %p64 = scmp.eq.s32.totalorder %s18, 0
      %p65 = por %p63, %p64
      %p66 = scmp.ne.s32.totalorder %s52, %s53
      %p67 = scmp.eq.s32.totalorder %s19, 1
      %p68 = por %p66, %p67
      %p70 = scmp.ne.s32.totalorder %s53, %s69
      %p71 = scmp.eq.s32.totalorder %s19, 0
      %p72 = por %p70, %p71
      %p73 = scmp.le.s32.totalorder 1, %s13
      %p74 = scmp.lt.s32.totalorder %s13, 3
      %p75 = pnand %p73, %p74
      %p76 = pneg %p75
      // Predicated region
      $region9: #{tpu_custom_call.1} parent=5 // pred_check
        _
      $region10: #{tpu_custom_call.1} parent=5 // pred_check_branch
        %78 = sbr.rel (%p75) target = $region12
      $region11: #{tpu_custom_call.1} parent=5 // pred_region
        %s79 = ssub.s32 %s13, 1
      $region12: #{tpu_custom_call.1} parent=5 // pred_fallthru
        _
      %p80 = scmp.lt.s32.totalorder %s13, 2
      // Predicated region
      $region13: #{tpu_custom_call.1} parent=5 // pred_check
        %p81 = pneg %p80
      $region14: #{tpu_custom_call.1} parent=5 // pred_check_branch
        %83 = sbr.rel (%p81) target = $region16
      $region15: #{tpu_custom_call.1} parent=5 // pred_region
        // Predicated region
        $region17: #{tpu_custom_call.1} parent=15 // pred_check
          %p84 = pneg %p33
        $region18: #{tpu_custom_call.1} parent=15 // pred_check_branch
          %86 = sbr.rel (%p84) target = $region20
        $region19: #{tpu_custom_call.1} parent=15 // pred_region
          %s87 = sand.u32 %s23, 1
          %s88 = scalar_lea.sflag [#allocation4], %s87
          %s89 = sand.u32 %s23, 1
          %s90 = smul.addr %s89, 48
          %s91 = scalar_lea.vmem [#allocation3], %s90
          %s92 = smul.u32 3, %s13
          %s94 = ssub.s32 768, 768
          %95 = vsyncadd %s88, %s94
          %s96 = smul.addr %s92, 2
          %s97 = smul.addr %s96, 128
          %s98 = scalar_lea.hbm %s0, %s97
          %s99 = sshll.u32 %s91, 4
          %s100 = int_to_ptr.vmem [resolvable:$true] %s99
          %105 = dma.hbm_to_vmem [thread:$0]  %s98, 768, %s100, %s88, 128, 128, 8
        $region20: #{tpu_custom_call.1} parent=15 // pred_fallthru
          _
      $region16: #{tpu_custom_call.1} parent=5 // pred_fallthru
        _
      %p106 = scmp.le.s32.totalorder 1, %s13
      %p107 = scmp.lt.s32.totalorder %s13, 3
      %p108 = pnand %p106, %p107
      %p109 = pneg %p108
      // Predicated region
      $region21: #{tpu_custom_call.1} parent=5 // pred_check
        _
      $region22: #{tpu_custom_call.1} parent=5 // pred_check_branch
        %111 = sbr.rel (%p108) target = $region24
      $region23: #{tpu_custom_call.1} parent=5 // pred_region
        %s112 = ssub.s32 %s13, 1
        %s113 = sand.u32 %s26, 1
        %s114 = scalar_lea.sflag [#allocation4], %s113
        %s115 = sand.u32 %s26, 1
        %s116 = smul.addr %s115, 48
        %s117 = scalar_lea.vmem [#allocation3], %s116
        // Predicated region
        $region25: #{tpu_custom_call.1} parent=23 // pred_check
          %p118 = pneg %p39
        $region26: #{tpu_custom_call.1} parent=23 // pred_check_branch
          %120 = sbr.rel (%p118) target = $region28
        $region27: #{tpu_custom_call.1} parent=23 // pred_region
          %121 = dma.done %s114, 768
        $region28: #{tpu_custom_call.1} parent=23 // pred_fallthru
          _
        %s122 = sand.u32 %s26, 1
        %s123 = scalar_lea.sflag [#allocation4], %s122
        %s124 = sand.u32 %s26, 1
        %s125 = smul.addr %s124, 48
        %s126 = scalar_lea.vmem [#allocation3], %s125
        %p127 = pneg %p39
        %p128 = pneg %p36
        %p129 = pneg %p65
        %p130 = pneg %p62
        %s131 = sand.u32 %s52, 1
        %s132 = scalar_lea.sflag [#allocation5], %s131
        %s133 = sand.u32 %s52, 1
        %s134 = smul.addr %s133, 48
        %s135 = scalar_lea.vmem [#allocation6], %s134
        %s136 = smul.u32 3, %s18
        %s137 = smul.u32 3, %s18
        %vm138 = vcmask 146432
        %139 = vst.msk [vmem:[#allocation2] sm:$0xff] %vm138, 0.0
        %140 = vst.msk [vmem:[#allocation2 + $0x8] sm:$0xff] %vm138, 0.0
        %vm141 = vcmask 140288
        %142 = vst.msk [vmem:[#allocation2 + $0x10] sm:$0x3] %vm141, 0.0
        %143 = vst.msk [vmem:[#allocation2 + $0x18] sm:$0xff] %vm138, 0.0
        %144 = vst.msk [vmem:[#allocation2 + $0x20] sm:$0xff] %vm138, 0.0
        %145 = vst.msk [vmem:[#allocation2 + $0x28] sm:$0x3] %vm141, 0.0
        %146 = vst.msk [vmem:[#allocation2 + $0x30] sm:$0xff] %vm138, 0.0
        %147 = vst.msk [vmem:[#allocation2 + $0x38] sm:$0xff] %vm138, 0.0
        %148 = vst.msk [vmem:[#allocation2 + $0x40] sm:$0x3] %vm141, 0.0
        %v149 = vld [vmem:[%s117] sm:$0xff]
        %v150 = vld [vmem:[%s117 + $0x8] sm:$0xff]
        %v151 = vld [vmem:[%s117 + $0x10] sm:$0xff]
        %v152 = vld [vmem:[%s117 + $0x18] sm:$0xff]
        %v153 = vld [vmem:[%s117 + $0x20] sm:$0xff]
        %v154 = vld [vmem:[%s117 + $0x28] sm:$0xff]
        %161 = vrot.lane.b32.xlu0 %v149, 1
        %v162 = vpop.permute.xlu0 %161
        %163 = vrot.lane.b32.xlu0 %v150, 1
        %v164 = vpop.permute.xlu0 %163
        %165 = vrot.lane.b32.xlu0 %v151, 1
        %v166 = vpop.permute.xlu0 %165
        %167 = vrot.lane.b32.xlu0 %v152, 1
        %v168 = vpop.permute.xlu0 %167
        %169 = vrot.lane.b32.xlu0 %v153, 1
        %v170 = vpop.permute.xlu0 %169
        %171 = vrot.lane.b32.xlu0 %v154, 1
        %v172 = vpop.permute.xlu0 %171
        %vm179 = vcmask 138248
        %180 = vst.msk [vmem:[#allocation2 + $0x1] sm:$0xff] %vm179, %v162
        %181 = vst.msk [vmem:[#allocation2 + $0x9] sm:$0xff] %vm179, %v164
        %182 = vst.msk [vmem:[#allocation2 + $0x19] sm:$0xff] %vm179, %v166
        %183 = vst.msk [vmem:[#allocation2 + $0x21] sm:$0xff] %vm179, %v168
        %184 = vst.msk [vmem:[#allocation2 + $0x31] sm:$0xff] %vm179, %v170
        %185 = vst.msk [vmem:[#allocation2 + $0x39] sm:$0xff] %vm179, %v172
        %v186 = vld [vmem:[#allocation2] sm:$0xff]
        %v187 = vld [vmem:[#allocation2 + $0x8] sm:$0xff]
        %v188 = vld [vmem:[#allocation2 + $0x10] sm:$0x3]
        %v189 = vld [vmem:[#allocation2 + $0x18] sm:$0xff]
        %v190 = vld [vmem:[#allocation2 + $0x20] sm:$0xff]
        %v191 = vld [vmem:[#allocation2 + $0x28] sm:$0x3]
        %v192 = vld [vmem:[#allocation2 + $0x30] sm:$0xff]
        %v193 = vld [vmem:[#allocation2 + $0x38] sm:$0xff]
        %v194 = vld [vmem:[#allocation2 + $0x40] sm:$0x3]
        %204 = vrot.lane.b32.xlu0 %v186, 126
        %v205 = vpop.permute.xlu0 %204
        %206 = vrot.lane.b32.xlu0 %v187, 126
        %v207 = vpop.permute.xlu0 %206
        %208 = vrot.lane.b32.xlu0 %v188, 126
        %v209 = vpop.permute.xlu0 %208
        %210 = vrot.lane.b32.xlu0 %v189, 126
        %v211 = vpop.permute.xlu0 %210
        %212 = vrot.lane.b32.xlu0 %v190, 126
        %v213 = vpop.permute.xlu0 %212
        %214 = vrot.lane.b32.xlu0 %v191, 126
        %v215 = vpop.permute.xlu0 %214
        %216 = vrot.lane.b32.xlu0 %v192, 126
        %v217 = vpop.permute.xlu0 %216
        %218 = vrot.lane.b32.xlu0 %v193, 126
        %v219 = vpop.permute.xlu0 %218
        %220 = vrot.lane.b32.xlu0 %v194, 126
        %v221 = vpop.permute.xlu0 %220
        %v231 = vadd.f32 %v186, %v205
        %v232 = vadd.f32 %v187, %v207
        %v233 = vadd.f32 %v188, %v209
        %v234 = vadd.f32 %v189, %v211
        %v235 = vadd.f32 %v190, %v213
        %v236 = vadd.f32 %v191, %v215
        %v237 = vadd.f32 %v192, %v217
        %v238 = vadd.f32 %v193, %v219
        %v239 = vadd.f32 %v194, %v221
        %v240 = vmul.f32 %v186, 2.0
        %v241 = vmul.f32 %v187, 2.0
        %v242 = vmul.f32 %v188, 2.0
        %v243 = vmul.f32 %v189, 2.0
        %v244 = vmul.f32 %v190, 2.0
        %v245 = vmul.f32 %v191, 2.0
        %v246 = vmul.f32 %v192, 2.0
        %v247 = vmul.f32 %v193, 2.0
        %v248 = vmul.f32 %v194, 2.0
        %258 = vrot.lane.b32.xlu0 %v240, 127
        %v259 = vpop.permute.xlu0 %258
        %260 = vrot.lane.b32.xlu0 %v241, 127
        %v261 = vpop.permute.xlu0 %260
        %262 = vrot.lane.b32.xlu0 %v242, 127
        %v263 = vpop.permute.xlu0 %262
        %264 = vrot.lane.b32.xlu0 %v243, 127
        %v265 = vpop.permute.xlu0 %264
        %266 = vrot.lane.b32.xlu0 %v244, 127
        %v267 = vpop.permute.xlu0 %266
        %268 = vrot.lane.b32.xlu0 %v245, 127
        %v269 = vpop.permute.xlu0 %268
        %270 = vrot.lane.b32.xlu0 %v246, 127
        %v271 = vpop.permute.xlu0 %270
        %272 = vrot.lane.b32.xlu0 %v247, 127
        %v273 = vpop.permute.xlu0 %272
        %274 = vrot.lane.b32.xlu0 %v248, 127
        %v275 = vpop.permute.xlu0 %274
        %v285 = vsub.f32 %v231, %v259
        %v286 = vsub.f32 %v232, %v261
        %v287 = vsub.f32 %v233, %v263
        %v288 = vsub.f32 %v234, %v265
        %v289 = vsub.f32 %v235, %v267
        %v290 = vsub.f32 %v236, %v269
        %v291 = vsub.f32 %v237, %v271
        %v292 = vsub.f32 %v238, %v273
        %v293 = vsub.f32 %v239, %v275
        %vm303 = vcmask 1045504
        %v304 = vrot.slane %v285, 2
        %v305 = vrot.slane %v286, 2
        %v306 = vsel %vm303, %v304, %v305
        %v307 = vrot.slane %v287, 2
        %v308 = vsel %vm303, %v305, %v307
        %v309 = vrot.slane %v288, 2
        %v310 = vrot.slane %v289, 2
        %v311 = vsel %vm303, %v309, %v310
        %v312 = vrot.slane %v290, 2
        %v313 = vsel %vm303, %v310, %v312
        %v314 = vrot.slane %v291, 2
        %v315 = vrot.slane %v292, 2
        %v316 = vsel %vm303, %v314, %v315
        %v317 = vrot.slane %v293, 2
        %v318 = vsel %vm303, %v315, %v317
        %v325 = vadd.f32 %v285, %v306
        %v326 = vadd.f32 %v286, %v308
        %v327 = vadd.f32 %v288, %v311
        %v328 = vadd.f32 %v289, %v313
        %v329 = vadd.f32 %v291, %v316
        %v330 = vadd.f32 %v292, %v318
        %v331 = vmul.f32 %v285, 2.0
        %v332 = vmul.f32 %v286, 2.0
        %v333 = vmul.f32 %v287, 2.0
        %v334 = vmul.f32 %v288, 2.0
        %v335 = vmul.f32 %v289, 2.0
        %v336 = vmul.f32 %v290, 2.0
        %v337 = vmul.f32 %v291, 2.0
        %v338 = vmul.f32 %v292, 2.0
        %v339 = vmul.f32 %v293, 2.0
        %vm349 = vcmask 1046528
        %v350 = vrot.slane %v331, 1
        %v351 = vrot.slane %v332, 1
        %v352 = vsel %vm349, %v350, %v351
        %v353 = vrot.slane %v333, 1
        %v354 = vsel %vm349, %v351, %v353
        %v355 = vrot.slane %v334, 1
        %v356 = vrot.slane %v335, 1
        %v357 = vsel %vm349, %v355, %v356
        %v358 = vrot.slane %v336, 1
        %v359 = vsel %vm349, %v356, %v358
        %v360 = vrot.slane %v337, 1
        %v361 = vrot.slane %v338, 1
        %v362 = vsel %vm349, %v360, %v361
        %v363 = vrot.slane %v339, 1
        %v364 = vsel %vm349, %v361, %v363
        %v371 = vsub.f32 %v325, %v352
        %v372 = vsub.f32 %v326, %v354
        %v373 = vsub.f32 %v327, %v357
        %v374 = vsub.f32 %v328, %v359
        %v375 = vsub.f32 %v329, %v362
        %v376 = vsub.f32 %v330, %v364
        %v377 = vmul.f32 %v371, -0.25
        %v378 = vmul.f32 %v372, -0.25
        %v379 = vmul.f32 %v373, -0.25
        %v380 = vmul.f32 %v374, -0.25
        %v381 = vmul.f32 %v375, -0.25
        %v382 = vmul.f32 %v376, -0.25
        %v383 = vmax.f32 %v377, -3.0
        %v384 = vmax.f32 %v378, -3.0
        %v385 = vmax.f32 %v379, -3.0
        %v386 = vmax.f32 %v380, -3.0
        %v387 = vmax.f32 %v381, -3.0
        %v388 = vmax.f32 %v382, -3.0
        %v389 = vmin.f32 %v383, 3.0
        %v390 = vmin.f32 %v384, 3.0
        %v391 = vmin.f32 %v385, 3.0
        %v392 = vmin.f32 %v386, 3.0
        %v393 = vmin.f32 %v387, 3.0
        %v394 = vmin.f32 %v388, 3.0
        %vm395 = vcmask 130048
        %396 = vst.msk [vmem:[%s135] sm:$0xff] %vm395, %v389
        %397 = vst.msk [vmem:[%s135 + $0x8] sm:$0xff] %vm395, %v390
        %398 = vst.msk [vmem:[%s135 + $0x10] sm:$0xff] %vm395, %v391
        %399 = vst.msk [vmem:[%s135 + $0x18] sm:$0xff] %vm395, %v392
        %400 = vst.msk [vmem:[%s135 + $0x20] sm:$0xff] %vm395, %v393
        %401 = vst.msk [vmem:[%s135 + $0x28] sm:$0xff] %vm395, %v394
        %s402 = sand.u32 %s52, 1
        %s403 = scalar_lea.sflag [#allocation5], %s402
        %s404 = sand.u32 %s52, 1
        %s405 = smul.addr %s404, 48
        %s406 = scalar_lea.vmem [#allocation6], %s405
        // Predicated region
        $region29: #{tpu_custom_call.1} parent=23 // pred_check
          %p407 = pneg %p62
        $region30: #{tpu_custom_call.1} parent=23 // pred_check_branch
          %409 = sbr.rel (%p407) target = $region32
        $region31: #{tpu_custom_call.1} parent=23 // pred_region
          %s410 = smul.u32 3, %s18
          %s412 = ssub.s32 768, 768
          %413 = vsyncadd %s403, %s412
          %s414 = smul.addr %s410, 2
          %s415 = smul.addr %s414, 128
          %s416 = scalar_lea.hbm %s1, %s415
          %s417 = sshll.u32 %s406, 4
          %s418 = int_to_ptr.vmem [resolvable:$true] %s417
          %423 = dma.vmem_to_hbm [thread:$0]  %s418, 768, %s416, %s403, 128, 128, 8
        $region32: #{tpu_custom_call.1} parent=23 // pred_fallthru
          _
      $region24: #{tpu_custom_call.1} parent=5 // pred_fallthru
        _
      %p424 = scmp.le.s32.totalorder 2, %s13
      // Predicated region
      $region33: #{tpu_custom_call.1} parent=5 // pred_check
        %p425 = pneg %p424
      $region34: #{tpu_custom_call.1} parent=5 // pred_check_branch
        %427 = sbr.rel (%p425) target = $region36
      $region35: #{tpu_custom_call.1} parent=5 // pred_region
        %s428 = ssub.s32 %s13, 2
        // Predicated region
        $region37: #{tpu_custom_call.1} parent=35 // pred_check
          %p429 = pneg %p68
        $region38: #{tpu_custom_call.1} parent=35 // pred_check_branch
          %431 = sbr.rel (%p429) target = $region40
        $region39: #{tpu_custom_call.1} parent=35 // pred_region
          %s432 = sand.u32 %s53, 1
          %s433 = scalar_lea.sflag [#allocation5], %s432
          %s434 = sand.u32 %s53, 1
          %s435 = smul.addr %s434, 48
          %s436 = scalar_lea.vmem [#allocation6], %s435
          %437 = dma.done %s433, 768
        $region40: #{tpu_custom_call.1} parent=35 // pred_fallthru
          _
      $region36: #{tpu_custom_call.1} parent=5 // pred_fallthru
        _
    $region6: #{tpu_custom_call.1} parent=1 // loop_footer
      %s17 = sadd.s32 1, %s13
    $region7: #{tpu_custom_call.1} parent=1 // loop_footer_branch
      %12 = sbr.rel target = $region3
    $region8: #{tpu_custom_call.1} parent=1 // loop_exit
      _
    %438 = vsyncpa [#allocation4], 1
    %s439 = scalar_lea.sflag [#allocation4], 1
    %440 = vsyncpa %s439, 1
    %441 = vsyncpa [#allocation5], 1
    %s442 = scalar_lea.sflag [#allocation5], 1
    %443 = vsyncpa %s442, 1

</llo_original>
